<compile_context>
chip_gen: v7x
topology: tpu7x:2x2x1
jax: 0.10.0
libtpu: 0.0.40
codegen_flags: <defaults>
</compile_context>

<pallas_src>
import jax
import jax.numpy as jnp
from jax import lax
from jax.experimental import pallas as pl
from jax.experimental.pallas import tpu as pltpu

_LANES = 128
_TARGET_F32_ELEMS = 512 * 1024          # ~2 MiB f32 per input tile
_VMEM_LIMIT_BYTES = 48 * 1024 * 1024    # > v5e 16 MiB scoped default, < v7x 64 MiB physical


def _pack_factor(A: int, R: int) -> int:
    """How many length-A rows to pack side-by-side along the lane axis."""
    if A >= _LANES or A <= 0 or (_LANES % A) != 0:
        return 1
    g = min(_LANES, max(1, 512 // A))        # target ~512 lanes per packed row
    while g > 1 and (R % g) != 0:            # keep the wrapper reshape free
        g //= 2
    return g


def _row_tile_for(width: int, target_f32_elems: int = _TARGET_F32_ELEMS) -> int:
    """Packed-row tile so one f32 input tile is ~2 MiB; multiple of 32 rows."""
    rows = max(32, target_f32_elems // max(width, 1))
    return max(32, (int(rows) // 32) * 32)


def _segment_pearson(x_raw, y_raw, A: int):
    """Per-(row, segment) Pearson correlation.

    x_raw, y_raw: (rows, G*A) tiles (any float dtype); each row holds G
    independent length-A segments along the lane axis.  Returns a (rows, 128)
    f32 array whose lane g < G is the Pearson correlation of segment g, and
    whose lanes >= G are exactly zero (so a plain sum over everything is the
    sum over real rows).
    """
    f32 = jnp.float32
    x = x_raw.astype(f32)
    y = y_raw.astype(f32)
    _, ga = x.shape

    # Block-diagonal ones weights built from iotas (no integer division):
    #   w[i, j]  = 1  iff  j*A <= i < (j+1)*A     (G*A, 128)  segment-sum
    #   wt[j, i] = 1  iff  j*A <= i < (j+1)*A     (128, G*A)  mean-broadcast
    i_w = lax.broadcasted_iota(jnp.int32, (ga, _LANES), 0)
    j_w = lax.broadcasted_iota(jnp.int32, (ga, _LANES), 1)
    d_w = i_w - j_w * A
    w = jnp.logical_and(d_w >= 0, d_w < A).astype(f32)

    j_t = lax.broadcasted_iota(jnp.int32, (_LANES, ga), 0)
    i_t = lax.broadcasted_iota(jnp.int32, (_LANES, ga), 1)
    d_t = i_t - j_t * A
    wt = jnp.logical_and(d_t >= 0, d_t < A).astype(f32)

    inv_a = 1.0 / float(A)

    # Segment sums on the (otherwise idle) MXU instead of cross-lane XLU sums.
    mean_x = jnp.dot(x, w, preferred_element_type=f32) * inv_a     # (rows, 128)
    mean_y = jnp.dot(y, w, preferred_element_type=f32) * inv_a
    # Broadcast each segment mean back over its A lanes (also an MXU matmul).
    xc = x - jnp.dot(mean_x, wt, preferred_element_type=f32)
    yc = y - jnp.dot(mean_y, wt, preferred_element_type=f32)

    sxx = jnp.dot(xc * xc, w, preferred_element_type=f32)           # (rows, 128)
    syy = jnp.dot(yc * yc, w, preferred_element_type=f32)
    sxy = jnp.dot(xc * yc, w, preferred_element_type=f32)

    denom = jnp.sqrt(sxx) * jnp.sqrt(syy) + 0.001                   # matches reference
    # Zero lanes (>= G): sxy = 0, denom = 0.001 -> pearson = 0.
    return sxy * pl.reciprocal(denom, approx=True)


def _make_small_kernel(A: int, n_rows: int):
    """Grid-less fast path: whole packed arrays resident in VMEM, scalar in SMEM."""

    def kernel(gt_ref, pre_ref, out_ref):
        pearson = _segment_pearson(gt_ref[...], pre_ref[...], A)
        out_ref[0, 0] = 1.0 - jnp.sum(pearson) * (1.0 / n_rows)

    return kernel


def _make_tile_kernel(A: int, n_packed_rows: int, row_tile: int):
    """Tiled path: each grid step handles row_tile packed rows -> one partial sum."""
    needs_mask = (n_packed_rows % row_tile) != 0

    def kernel(gt_ref, pre_ref, out_ref):
        pearson = _segment_pearson(gt_ref[...], pre_ref[...], A)     # (row_tile, 128)

        if needs_mask:
            row0 = pl.program_id(0) * row_tile
            rid = row0 + lax.broadcasted_iota(jnp.int32, pearson.shape, 0)
            pearson = jnp.where(rid < n_packed_rows, pearson, 0.0)

        out_ref[...] = jnp.broadcast_to(jnp.sum(pearson), out_ref.shape)

    return kernel


def p_loss3(gt_lable: jax.Array, pre_lable: jax.Array, *, row_tile=None) -> jax.Array:
    """JAX/Pallas equivalent of P_loss3.forward for 3-D (M, N, A) inputs."""
    assert gt_lable.shape == pre_lable.shape, "shape mismatch"
    if gt_lable.ndim != 3:
        # TODO(synk): PyTorch's non-3D branches either raise (2-D) or return a
        # non-scalar tensor (>=4-D); only the intended 3-D path is implemented.
        raise NotImplementedError("P_loss3 Pallas kernel supports 3-D (M, N, A) inputs only")

    M, N, A = gt_lable.shape
    R = M * N
    G = _pack_factor(A, R)           # rows packed per lane-group
    GA = G * A
    Rp = R // G                      # packed row count

    # Free reshapes (row-major contiguous): (M,N,A) -> (Rp, G*A).  Native dtype
    # is preserved so the HBM->VMEM DMA moves bf16-sized bytes for bf16 inputs.
    gt2 = gt_lable.reshape(Rp, GA)
    pre2 = pre_lable.reshape(Rp, GA)

    if row_tile is None:
        row_tile = _row_tile_for(GA)
    row_tile = max(32, (int(row_tile) // 32) * 32)

    itemsize = jnp.dtype(gt_lable.dtype).itemsize
    cost = pl.CostEstimate(
        flops=int(16 * R * A),
        transcendentals=int(3 * R),
        bytes_accessed=int(2 * R * A * itemsize) + 4 * _LANES,
    )

    if Rp <= row_tile:
        # Small-input fast path (footprint bounded by the ~2 MiB tile target).
        out = pl.pallas_call(
            _make_small_kernel(A, R),
            out_shape=jax.ShapeDtypeStruct((1, 1), jnp.float32),
            in_specs=[
                pl.BlockSpec(memory_space=pltpu.MemorySpace.VMEM),
                pl.BlockSpec(memory_space=pltpu.MemorySpace.VMEM),
            ],
            out_specs=pl.BlockSpec(memory_space=pltpu.MemorySpace.SMEM),
            compiler_params=pltpu.CompilerParams(vmem_limit_bytes=_VMEM_LIMIT_BYTES),
            cost_estimate=cost,
        )(gt2, pre2)
        return out[0, 0]

    num_tiles = pl.cdiv(Rp, row_tile)
    partials = pl.pallas_call(
        _make_tile_kernel(A, Rp, row_tile),
        out_shape=jax.ShapeDtypeStruct((num_tiles, _LANES), jnp.float32),
        grid=(num_tiles,),
        in_specs=[
            pl.BlockSpec((row_tile, GA), lambda i: (i, 0)),
            pl.BlockSpec((row_tile, GA), lambda i: (i, 0)),
        ],
        out_specs=pl.BlockSpec((1, _LANES), lambda i: (i, 0)),
        compiler_params=pltpu.CompilerParams(
            dimension_semantics=("parallel",),
            vmem_limit_bytes=_VMEM_LIMIT_BYTES,
        ),
        cost_estimate=cost,
    )(gt2, pre2)

    # Tiny trailing reduction over the per-tile partial sums (num_tiles scalars).
    return 1.0 - jnp.sum(partials[:, 0]) * (1.0 / R)


def _reference(gt, pre):
    """Pure-JAX reference mirroring the PyTorch forward (3-D path)."""
    gt = gt.astype(jnp.float32)
    pre = pre.astype(jnp.float32)
    gt = gt - jnp.mean(gt, axis=2, keepdims=True)
    pre = pre - jnp.mean(pre, axis=2, keepdims=True)
    a_pow = jnp.sqrt(jnp.sum(gt * gt, axis=-1))
    b_pow = jnp.sqrt(jnp.sum(pre * pre, axis=-1))
    pearson = jnp.sum(gt * pre, axis=-1) / (a_pow * b_pow + 0.001)
    return 1.0 - jnp.sum(pearson) / (gt.shape[0] * gt.shape[1])


if __name__ == "__main__":
    key = jax.random.PRNGKey(0)
    k1, k2, k3, k4, k5, k6 = jax.random.split(key, 6)

    # 1) Tiny 3-D f32 input (A=16 -> lane-packed, G=16) -> grid-less fast path.
    M, N, A = 2, 8, 16
    gt = jax.random.normal(k1, (M, N, A), dtype=jnp.float32)
    pre = jax.random.normal(k2, (M, N, A), dtype=jnp.float32)
    loss = jax.block_until_ready(p_loss3(gt, pre))
    ref = jax.block_until_ready(_reference(gt, pre))
    assert jnp.allclose(loss, ref, atol=5e-3, rtol=5e-3), (loss, ref)

    # 2) Larger 3-D input with a forced small packed-row tile -> tiled + masked
    #    path (R=1000 rows, G=8 -> 125 packed rows, row_tile=32 -> 4 grid steps,
    #    last tile partial).
    M2, N2, A2 = 4, 250, 16
    gt_big = jax.random.normal(k3, (M2, N2, A2), dtype=jnp.float32)
    pre_big = jax.random.normal(k4, (M2, N2, A2), dtype=jnp.float32)
    loss_big = jax.block_until_ready(p_loss3(gt_big, pre_big, row_tile=32))
    ref_big = jax.block_until_ready(_reference(gt_big, pre_big))
    assert jnp.allclose(loss_big, ref_big, atol=5e-3, rtol=5e-3), (loss_big, ref_big)

    # 3) A=128 (no packing, G=1) exercises the unpacked code path.
    M3, N3, A3 = 2, 16, 128
    gt_w = jax.random.normal(k5, (M3, N3, A3), dtype=jnp.float32)
    pre_w = jax.random.normal(k6, (M3, N3, A3), dtype=jnp.float32)
    loss_w = jax.block_until_ready(p_loss3(gt_w, pre_w))
    ref_w = jax.block_until_ready(_reference(gt_w, pre_w))
    assert jnp.allclose(loss_w, ref_w, atol=5e-3, rtol=5e-3), (loss_w, ref_w)

    # 4) bf16 inputs: DMA'd at native width, cast to f32 inside the kernel.
    gt_bf = gt.astype(jnp.bfloat16)
    pre_bf = pre.astype(jnp.bfloat16)
    loss_bf = jax.block_until_ready(p_loss3(gt_bf, pre_bf))
    ref_bf = jax.block_until_ready(_reference(gt_bf, pre_bf))
    assert jnp.allclose(loss_bf, ref_bf, atol=5e-3, rtol=5e-3), (loss_bf, ref_bf)

    print("KERNEL_OK")
</pallas_src>

<mosaic_0001>
module attributes {stable_mosaic.version = 11 : i64} {
  func.func @kernel(%arg0: memref<1x256xf32, #tpu.memory_space<vmem>>, %arg1: memref<1x256xf32, #tpu.memory_space<vmem>>, %arg2: memref<1x1xf32, #tpu.memory_space<smem>>) attributes {dimension_semantics = [], scalar_prefetch = 0 : i64, scratch_operands = 0 : i64, tpu.core_type = #tpu.core_type<tc>} {
    %c0 = arith.constant 0 : index
    %c0_0 = arith.constant 0 : index
    %0 = vector.load %arg0[%c0, %c0_0] : memref<1x256xf32, #tpu.memory_space<vmem>>, vector<1x256xf32>
    %c0_1 = arith.constant 0 : index
    %c0_2 = arith.constant 0 : index
    %1 = vector.load %arg1[%c0_1, %c0_2] : memref<1x256xf32, #tpu.memory_space<vmem>>, vector<1x256xf32>
    %2 = tpu.iota {dimensions = array<i32: 0>} : vector<256x128xi32>
    %3 = tpu.iota {dimensions = array<i32: 1>} : vector<256x128xi32>
    %c16_i32 = arith.constant 16 : i32
    %4 = vector.broadcast %c16_i32 : i32 to vector<256x128xi32>
    %5 = arith.muli %3, %4 : vector<256x128xi32>
    %6 = arith.subi %2, %5 : vector<256x128xi32>
    %c0_i32 = arith.constant 0 : i32
    %7 = vector.broadcast %c0_i32 : i32 to vector<256x128xi32>
    %8 = arith.cmpi sge, %6, %7 : vector<256x128xi32>
    %c16_i32_3 = arith.constant 16 : i32
    %9 = vector.broadcast %c16_i32_3 : i32 to vector<256x128xi32>
    %10 = arith.cmpi slt, %6, %9 : vector<256x128xi32>
    %11 = arith.andi %8, %10 : vector<256x128xi1>
    %12 = arith.extui %11 : vector<256x128xi1> to vector<256x128xi32>
    %13 = arith.sitofp %12 : vector<256x128xi32> to vector<256x128xf32>
    %14 = tpu.iota {dimensions = array<i32: 0>} : vector<128x256xi32>
    %15 = tpu.iota {dimensions = array<i32: 1>} : vector<128x256xi32>
    %c16_i32_4 = arith.constant 16 : i32
    %16 = vector.broadcast %c16_i32_4 : i32 to vector<128x256xi32>
    %17 = arith.muli %14, %16 : vector<128x256xi32>
    %18 = arith.subi %15, %17 : vector<128x256xi32>
    %c0_i32_5 = arith.constant 0 : i32
    %19 = vector.broadcast %c0_i32_5 : i32 to vector<128x256xi32>
    %20 = arith.cmpi sge, %18, %19 : vector<128x256xi32>
    %c16_i32_6 = arith.constant 16 : i32
    %21 = vector.broadcast %c16_i32_6 : i32 to vector<128x256xi32>
    %22 = arith.cmpi slt, %18, %21 : vector<128x256xi32>
    %23 = arith.andi %20, %22 : vector<128x256xi1>
    %24 = arith.extui %23 : vector<128x256xi1> to vector<128x256xi32>
    %25 = arith.sitofp %24 : vector<128x256xi32> to vector<128x256xf32>
    %cst = arith.constant dense<0.000000e+00> : vector<1x128xf32>
    %26 = tpu.matmul %0, %13, %cst {dimension_numbers = #tpu.dot_dimension_numbers<[1], [0], [0], [1], [0, 0, 1, 1], [], []>} : vector<1x256xf32>, vector<256x128xf32>, vector<1x128xf32> -> vector<1x128xf32>
    %cst_7 = arith.constant 6.250000e-02 : f32
    %27 = vector.broadcast %cst_7 : f32 to vector<1x128xf32>
    %28 = arith.mulf %26, %27 : vector<1x128xf32>
    %cst_8 = arith.constant dense<0.000000e+00> : vector<1x128xf32>
    %29 = tpu.matmul %1, %13, %cst_8 {dimension_numbers = #tpu.dot_dimension_numbers<[1], [0], [0], [1], [0, 0, 1, 1], [], []>} : vector<1x256xf32>, vector<256x128xf32>, vector<1x128xf32> -> vector<1x128xf32>
    %cst_9 = arith.constant 6.250000e-02 : f32
    %30 = vector.broadcast %cst_9 : f32 to vector<1x128xf32>
    %31 = arith.mulf %29, %30 : vector<1x128xf32>
    %cst_10 = arith.constant dense<0.000000e+00> : vector<1x256xf32>
    %32 = tpu.matmul %28, %25, %cst_10 {dimension_numbers = #tpu.dot_dimension_numbers<[1], [0], [0], [1], [0, 0, 1, 1], [], []>} : vector<1x128xf32>, vector<128x256xf32>, vector<1x256xf32> -> vector<1x256xf32>
    %33 = arith.subf %0, %32 : vector<1x256xf32>
    %cst_11 = arith.constant dense<0.000000e+00> : vector<1x256xf32>
    %34 = tpu.matmul %31, %25, %cst_11 {dimension_numbers = #tpu.dot_dimension_numbers<[1], [0], [0], [1], [0, 0, 1, 1], [], []>} : vector<1x128xf32>, vector<128x256xf32>, vector<1x256xf32> -> vector<1x256xf32>
    %35 = arith.subf %1, %34 : vector<1x256xf32>
    %36 = arith.mulf %33, %33 : vector<1x256xf32>
    %cst_12 = arith.constant dense<0.000000e+00> : vector<1x128xf32>
    %37 = tpu.matmul %36, %13, %cst_12 {dimension_numbers = #tpu.dot_dimension_numbers<[1], [0], [0], [1], [0, 0, 1, 1], [], []>} : vector<1x256xf32>, vector<256x128xf32>, vector<1x128xf32> -> vector<1x128xf32>
    %38 = arith.mulf %35, %35 : vector<1x256xf32>
    %cst_13 = arith.constant dense<0.000000e+00> : vector<1x128xf32>
    %39 = tpu.matmul %38, %13, %cst_13 {dimension_numbers = #tpu.dot_dimension_numbers<[1], [0], [0], [1], [0, 0, 1, 1], [], []>} : vector<1x256xf32>, vector<256x128xf32>, vector<1x128xf32> -> vector<1x128xf32>
    %40 = arith.mulf %33, %35 : vector<1x256xf32>
    %cst_14 = arith.constant dense<0.000000e+00> : vector<1x128xf32>
    %41 = tpu.matmul %40, %13, %cst_14 {dimension_numbers = #tpu.dot_dimension_numbers<[1], [0], [0], [1], [0, 0, 1, 1], [], []>} : vector<1x256xf32>, vector<256x128xf32>, vector<1x128xf32> -> vector<1x128xf32>
    %42 = math.sqrt %37 : vector<1x128xf32>
    %43 = math.sqrt %39 : vector<1x128xf32>
    %44 = arith.mulf %42, %43 : vector<1x128xf32>
    %cst_15 = arith.constant 1.000000e-03 : f32
    %45 = vector.broadcast %cst_15 : f32 to vector<1x128xf32>
    %46 = arith.addf %44, %45 : vector<1x128xf32>
    %47 = tpu.reciprocal %46 {approx = true} : vector<1x128xf32> -> vector<1x128xf32>
    %48 = arith.mulf %41, %47 : vector<1x128xf32>
    %49 = vector.shape_cast %48 : vector<1x128xf32> to vector<1x1x128xf32>
    %cst_16 = arith.constant dense<0.000000e+00> : vector<1xf32>
    %50 = vector.multi_reduction <add>, %49, %cst_16 [1, 2] : vector<1x1x128xf32> to vector<1xf32>
    %51 = vector.shape_cast %50 : vector<1xf32> to vector<1x1x1xf32>
    %52 = vector.extract %51[0, 0, 0] : f32 from vector<1x1x1xf32>
    %cst_17 = arith.constant 6.250000e-02 : f32
    %53 = arith.mulf %52, %cst_17 : f32
    %cst_18 = arith.constant 1.000000e+00 : f32
    %54 = arith.subf %cst_18, %53 : f32
    %c0_19 = arith.constant 0 : index
    %c0_20 = arith.constant 0 : index
    %55 = memref.load %arg2[%c0_19, %c0_20] : memref<1x1xf32, #tpu.memory_space<smem>>
    memref.store %54, %arg2[%c0_19, %c0_20] : memref<1x1xf32, #tpu.memory_space<smem>>
    return
  }
}

</mosaic_0001>

<llo_original>
// kernel: tpu_custom_call.1
$region0: #{tpu_custom_call.1}
  #allocation0 [shape = 'u32[]', space=smem, size = 0x4, offset = 0x4, fixed_abs, tag = 'smem constant byte address 0x4 - core index']
  #allocation1 [shape = 'u32[144,128]{1,0:T(1,128)}', space=vmem, size = 0x12000, scoped, tag = 'internal scratch']
  %s0 = inlined_call_operand.hbm [shape: f32[1,256], index: 0, kind: input, shape index: {}]
  %s1 = inlined_call_operand.vmem [shape: f32[1,256], index: 1, kind: input, shape index: {}]
  %s2 = inlined_call_operand.hbm [shape: f32[1,1], index: 2, kind: output, shape index: {}]
  %s3 = sld [smem:[#allocation0]]
  $region22: #{tpu_custom_call.1} parent=0
    _
  %s5 = ssub.s32 1, %s3
  %s6 = scalar_select 0, %s5, %s3
  $region1: #{tpu_custom_call.1} parent=0
    #allocation2 [shape = 'u8[1024]{0}', space=vmem, size = 0x400, scoped, tag = 'input window, operand 0, single buffered']
    #allocation3 [shape = 's32[1]{0}', space=sflag, size = 0x4, scoped, tag = 'scoped memory for tpu_custom_call.1']
    #allocation4 [shape = 's32[1]{0}', space=sflag, size = 0x4, scoped, tag = 'scoped memory for tpu_custom_call.1']
    #allocation5 [shape = 'u8[512]{0}', space=smem, size = 0x200, scoped, tag = 'output window, operand 0, single buffered']
    %7 = vsyncpa [#allocation3], 0
    %8 = vsyncpa [#allocation4], 0
    // Predicated region
    $region2: #{tpu_custom_call.1} parent=1 // pred_check
      _
    $region3: #{tpu_custom_call.1} parent=1 // pred_check_branch
      %10 = sbr.rel (0) target = $region5
    $region4: #{tpu_custom_call.1} parent=1 // pred_region
      %s12 = ssub.s32 32, 32
      %13 = vsyncadd [#allocation3], %s12
      %s15 = sshll.u32 [#allocation2], 4
      %s16 = int_to_ptr.vmem [resolvable:$true] %s15
      %18 = dma.hbm_to_vmem [thread:$0]  %s0, 32, %s16, [#allocation3]
    $region5: #{tpu_custom_call.1} parent=1 // pred_fallthru
      _
    // Predicated region
    $region6: #{tpu_custom_call.1} parent=1 // pred_check
      _
    $region7: #{tpu_custom_call.1} parent=1 // pred_check_branch
      %20 = sbr.rel (0) target = $region9
    $region8: #{tpu_custom_call.1} parent=1 // pred_region
      _
    $region9: #{tpu_custom_call.1} parent=1 // pred_fallthru
      _
    // Predicated region
    $region10: #{tpu_custom_call.1} parent=1 // pred_check
      _
    $region11: #{tpu_custom_call.1} parent=1 // pred_check_branch
      %22 = sbr.rel (0) target = $region13
    $region12: #{tpu_custom_call.1} parent=1 // pred_region
      %23 = dma.done [#allocation3], 32
    $region13: #{tpu_custom_call.1} parent=1 // pred_fallthru
      _
    %v24 = vld [vmem:[#allocation2] sm:$0x3]
    %v25 = vld [vmem:[%s1] sm:$0x3]
    %v26 = vlaneseq
    %v27 = vshrl.u32 %v26, 7
    %v28 = vadd.s32 %v27, 8
    %v29 = vadd.s32 %v27, 16
    %v30 = vadd.s32 %v27, 24
    %v31 = vadd.s32 %v27, 32
    %v32 = vadd.s32 %v27, 40
    %v33 = vadd.s32 %v27, 48
    %v34 = vadd.s32 %v27, 56
    %v35 = vadd.s32 %v27, 64
    %v36 = vadd.s32 %v27, 72
    %v37 = vadd.s32 %v27, 80
    %v38 = vadd.s32 %v27, 88
    %v39 = vadd.s32 %v27, 96
    %v40 = vadd.s32 %v27, 104
    %v41 = vadd.s32 %v27, 112
    %v42 = vadd.s32 %v27, 120
    %v43 = vadd.s32 %v27, 128
    %v44 = vadd.s32 %v27, 136
    %v45 = vadd.s32 %v27, 144
    %v46 = vadd.s32 %v27, 152
    %v47 = vadd.s32 %v27, 160
    %v48 = vadd.s32 %v27, 168
    %v49 = vadd.s32 %v27, 176
    %v50 = vadd.s32 %v27, 184
    %v51 = vadd.s32 %v27, 192
    %v52 = vadd.s32 %v27, 200
    %v53 = vadd.s32 %v27, 208
    %v54 = vadd.s32 %v27, 216
    %v55 = vadd.s32 %v27, 224
    %v56 = vadd.s32 %v27, 232
    %v57 = vadd.s32 %v27, 240
    %v58 = vadd.s32 %v27, 248
    %v59 = vlaneseq
    %v60 = vand.u32 %v59, 127
    %v61 = vmul.u32 %v60, 16
    %v62 = vsub.s32 %v27, %v61
    %v63 = vsub.s32 %v28, %v61
    %v64 = vsub.s32 %v29, %v61
    %v65 = vsub.s32 %v30, %v61
    %v66 = vsub.s32 %v31, %v61
    %v67 = vsub.s32 %v32, %v61
    %v68 = vsub.s32 %v33, %v61
    %v69 = vsub.s32 %v34, %v61
    %v70 = vsub.s32 %v35, %v61
    %v71 = vsub.s32 %v36, %v61
    %v72 = vsub.s32 %v37, %v61
    %v73 = vsub.s32 %v38, %v61
    %v74 = vsub.s32 %v39, %v61
    %v75 = vsub.s32 %v40, %v61
    %v76 = vsub.s32 %v41, %v61
    %v77 = vsub.s32 %v42, %v61
    %v78 = vsub.s32 %v43, %v61
    %v79 = vsub.s32 %v44, %v61
    %v80 = vsub.s32 %v45, %v61
    %v81 = vsub.s32 %v46, %v61
    %v82 = vsub.s32 %v47, %v61
    %v83 = vsub.s32 %v48, %v61
    %v84 = vsub.s32 %v49, %v61
    %v85 = vsub.s32 %v50, %v61
    %v86 = vsub.s32 %v51, %v61
    %v87 = vsub.s32 %v52, %v61
    %v88 = vsub.s32 %v53, %v61
    %v89 = vsub.s32 %v54, %v61
    %v90 = vsub.s32 %v55, %v61
    %v91 = vsub.s32 %v56, %v61
    %v92 = vsub.s32 %v57, %v61
    %v93 = vsub.s32 %v58, %v61
    %vm94 = vcmp.ge.s32.totalorder %v62, 0
    %vm95 = vcmp.ge.s32.totalorder %v63, 0
    %vm96 = vcmp.ge.s32.totalorder %v64, 0
    %vm97 = vcmp.ge.s32.totalorder %v65, 0
    %vm98 = vcmp.ge.s32.totalorder %v66, 0
    %vm99 = vcmp.ge.s32.totalorder %v67, 0
    %vm100 = vcmp.ge.s32.totalorder %v68, 0
    %vm101 = vcmp.ge.s32.totalorder %v69, 0
    %vm102 = vcmp.ge.s32.totalorder %v70, 0
    %vm103 = vcmp.ge.s32.totalorder %v71, 0
    %vm104 = vcmp.ge.s32.totalorder %v72, 0
    %vm105 = vcmp.ge.s32.totalorder %v73, 0
    %vm106 = vcmp.ge.s32.totalorder %v74, 0
    %vm107 = vcmp.ge.s32.totalorder %v75, 0
    %vm108 = vcmp.ge.s32.totalorder %v76, 0
    %vm109 = vcmp.ge.s32.totalorder %v77, 0
    %vm110 = vcmp.ge.s32.totalorder %v78, 0
    %vm111 = vcmp.ge.s32.totalorder %v79, 0
    %vm112 = vcmp.ge.s32.totalorder %v80, 0
    %vm113 = vcmp.ge.s32.totalorder %v81, 0
    %vm114 = vcmp.ge.s32.totalorder %v82, 0
    %vm115 = vcmp.ge.s32.totalorder %v83, 0
    %vm116 = vcmp.ge.s32.totalorder %v84, 0
    %vm117 = vcmp.ge.s32.totalorder %v85, 0
    %vm118 = vcmp.ge.s32.totalorder %v86, 0
    %vm119 = vcmp.ge.s32.totalorder %v87, 0
    %vm120 = vcmp.ge.s32.totalorder %v88, 0
    %vm121 = vcmp.ge.s32.totalorder %v89, 0
    %vm122 = vcmp.ge.s32.totalorder %v90, 0
    %vm123 = vcmp.ge.s32.totalorder %v91, 0
    %vm124 = vcmp.ge.s32.totalorder %v92, 0
    %vm125 = vcmp.ge.s32.totalorder %v93, 0
    %vm126 = vcmp.lt.s32.totalorder %v62, 16
    %vm127 = vcmp.lt.s32.totalorder %v63, 16
    %vm128 = vcmp.lt.s32.totalorder %v64, 16
    %vm129 = vcmp.lt.s32.totalorder %v65, 16
    %vm130 = vcmp.lt.s32.totalorder %v66, 16
    %vm131 = vcmp.lt.s32.totalorder %v67, 16
    %vm132 = vcmp.lt.s32.totalorder %v68, 16
    %vm133 = vcmp.lt.s32.totalorder %v69, 16
    %vm134 = vcmp.lt.s32.totalorder %v70, 16
    %vm135 = vcmp.lt.s32.totalorder %v71, 16
    %vm136 = vcmp.lt.s32.totalorder %v72, 16
    %vm137 = vcmp.lt.s32.totalorder %v73, 16
    %vm138 = vcmp.lt.s32.totalorder %v74, 16
    %vm139 = vcmp.lt.s32.totalorder %v75, 16
    %vm140 = vcmp.lt.s32.totalorder %v76, 16
    %vm141 = vcmp.lt.s32.totalorder %v77, 16
    %vm142 = vcmp.lt.s32.totalorder %v78, 16
    %vm143 = vcmp.lt.s32.totalorder %v79, 16
    %vm144 = vcmp.lt.s32.totalorder %v80, 16
    %vm145 = vcmp.lt.s32.totalorder %v81, 16
    %vm146 = vcmp.lt.s32.totalorder %v82, 16
    %vm147 = vcmp.lt.s32.totalorder %v83, 16
    %vm148 = vcmp.lt.s32.totalorder %v84, 16
    %vm149 = vcmp.lt.s32.totalorder %v85, 16
    %vm150 = vcmp.lt.s32.totalorder %v86, 16
    %vm151 = vcmp.lt.s32.totalorder %v87, 16
    %vm152 = vcmp.lt.s32.totalorder %v88, 16
    %vm153 = vcmp.lt.s32.totalorder %v89, 16
    %vm154 = vcmp.lt.s32.totalorder %v90, 16
    %vm155 = vcmp.lt.s32.totalorder %v91, 16
    %vm156 = vcmp.lt.s32.totalorder %v92, 16
    %vm157 = vcmp.lt.s32.totalorder %v93, 16
    %vm158 = vmand %vm94, %vm126
    %vm159 = vmand %vm95, %vm127
    %vm160 = vmand %vm96, %vm128
    %vm161 = vmand %vm97, %vm129
    %vm162 = vmand %vm98, %vm130
    %vm163 = vmand %vm99, %vm131
    %vm164 = vmand %vm100, %vm132
    %vm165 = vmand %vm101, %vm133
    %vm166 = vmand %vm102, %vm134
    %vm167 = vmand %vm103, %vm135
    %vm168 = vmand %vm104, %vm136
    %vm169 = vmand %vm105, %vm137
    %vm170 = vmand %vm106, %vm138
    %vm171 = vmand %vm107, %vm139
    %vm172 = vmand %vm108, %vm140
    %vm173 = vmand %vm109, %vm141
    %vm174 = vmand %vm110, %vm142
    %vm175 = vmand %vm111, %vm143
    %vm176 = vmand %vm112, %vm144
    %vm177 = vmand %vm113, %vm145
    %vm178 = vmand %vm114, %vm146
    %vm179 = vmand %vm115, %vm147
    %vm180 = vmand %vm116, %vm148
    %vm181 = vmand %vm117, %vm149
    %vm182 = vmand %vm118, %vm150
    %vm183 = vmand %vm119, %vm151
    %vm184 = vmand %vm120, %vm152
    %vm185 = vmand %vm121, %vm153
    %vm186 = vmand %vm122, %vm154
    %vm187 = vmand %vm123, %vm155
    %vm188 = vmand %vm124, %vm156
    %vm189 = vmand %vm125, %vm157
    %v190 = vsel %vm158, 1, 0
    %v191 = vsel %vm159, 1, 0
    %v192 = vsel %vm160, 1, 0
    %v193 = vsel %vm161, 1, 0
    %v194 = vsel %vm162, 1, 0
    %v195 = vsel %vm163, 1, 0
    %v196 = vsel %vm164, 1, 0
    %v197 = vsel %vm165, 1, 0
    %v198 = vsel %vm166, 1, 0
    %v199 = vsel %vm167, 1, 0
    %v200 = vsel %vm168, 1, 0
    %v201 = vsel %vm169, 1, 0
    %v202 = vsel %vm170, 1, 0
    %v203 = vsel %vm171, 1, 0
    %v204 = vsel %vm172, 1, 0
    %v205 = vsel %vm173, 1, 0
    %v206 = vsel %vm174, 1, 0
    %v207 = vsel %vm175, 1, 0
    %v208 = vsel %vm176, 1, 0
    %v209 = vsel %vm177, 1, 0
    %v210 = vsel %vm178, 1, 0
    %v211 = vsel %vm179, 1, 0
    %v212 = vsel %vm180, 1, 0
    %v213 = vsel %vm181, 1, 0
    %v214 = vsel %vm182, 1, 0
    %v215 = vsel %vm183, 1, 0
    %v216 = vsel %vm184, 1, 0
    %v217 = vsel %vm185, 1, 0
    %v218 = vsel %vm186, 1, 0
    %v219 = vsel %vm187, 1, 0
    %v220 = vsel %vm188, 1, 0
    %v221 = vsel %vm189, 1, 0
    %v222 = vcvt.s32.f32 %v190
    %v223 = vcvt.s32.f32 %v191
    %v224 = vcvt.s32.f32 %v192
    %v225 = vcvt.s32.f32 %v193
    %v226 = vcvt.s32.f32 %v194
    %v227 = vcvt.s32.f32 %v195
    %v228 = vcvt.s32.f32 %v196
    %v229 = vcvt.s32.f32 %v197
    %v230 = vcvt.s32.f32 %v198
    %v231 = vcvt.s32.f32 %v199
    %v232 = vcvt.s32.f32 %v200
    %v233 = vcvt.s32.f32 %v201
    %v234 = vcvt.s32.f32 %v202
    %v235 = vcvt.s32.f32 %v203
    %v236 = vcvt.s32.f32 %v204
    %v237 = vcvt.s32.f32 %v205
    %v238 = vcvt.s32.f32 %v206
    %v239 = vcvt.s32.f32 %v207
    %v240 = vcvt.s32.f32 %v208
    %v241 = vcvt.s32.f32 %v209
    %v242 = vcvt.s32.f32 %v210
    %v243 = vcvt.s32.f32 %v211
    %v244 = vcvt.s32.f32 %v212
    %v245 = vcvt.s32.f32 %v213
    %v246 = vcvt.s32.f32 %v214
    %v247 = vcvt.s32.f32 %v215
    %v248 = vcvt.s32.f32 %v216
    %v249 = vcvt.s32.f32 %v217
    %v250 = vcvt.s32.f32 %v218
    %v251 = vcvt.s32.f32 %v219
    %v252 = vcvt.s32.f32 %v220
    %v253 = vcvt.s32.f32 %v221
    %v254 = vadd.s32 %v60, 128
    %v255 = vmul.u32 %v27, 16
    %v256 = vmul.u32 %v28, 16
    %v257 = vmul.u32 %v29, 16
    %v258 = vmul.u32 %v30, 16
    %v259 = vmul.u32 %v31, 16
    %v260 = vmul.u32 %v32, 16
    %v261 = vmul.u32 %v33, 16
    %v262 = vmul.u32 %v34, 16
    %v263 = vmul.u32 %v35, 16
    %v264 = vmul.u32 %v36, 16
    %v265 = vmul.u32 %v37, 16
    %v266 = vmul.u32 %v38, 16
    %v267 = vmul.u32 %v39, 16
    %v268 = vmul.u32 %v40, 16
    %v269 = vmul.u32 %v41, 16
    %v270 = vmul.u32 %v42, 16
    %v271 = vsub.s32 %v60, %v255
    %v272 = vsub.s32 %v254, %v255
    %v273 = vsub.s32 %v60, %v256
    %v274 = vsub.s32 %v254, %v256
    %v275 = vsub.s32 %v60, %v257
    %v276 = vsub.s32 %v254, %v257
    %v277 = vsub.s32 %v60, %v258
    %v278 = vsub.s32 %v254, %v258
    %v279 = vsub.s32 %v60, %v259
    %v280 = vsub.s32 %v254, %v259
    %v281 = vsub.s32 %v60, %v260
    %v282 = vsub.s32 %v254, %v260
    %v283 = vsub.s32 %v60, %v261
    %v284 = vsub.s32 %v254, %v261
    %v285 = vsub.s32 %v60, %v262
    %v286 = vsub.s32 %v254, %v262
    %v287 = vsub.s32 %v60, %v263
    %v288 = vsub.s32 %v254, %v263
    %v289 = vsub.s32 %v60, %v264
    %v290 = vsub.s32 %v254, %v264
    %v291 = vsub.s32 %v60, %v265
    %v292 = vsub.s32 %v254, %v265
    %v293 = vsub.s32 %v60, %v266
    %v294 = vsub.s32 %v254, %v266
    %v295 = vsub.s32 %v60, %v267
    %v296 = vsub.s32 %v254, %v267
    %v297 = vsub.s32 %v60, %v268
    %v298 = vsub.s32 %v254, %v268
    %v299 = vsub.s32 %v60, %v269
    %v300 = vsub.s32 %v254, %v269
    %v301 = vsub.s32 %v60, %v270
    %v302 = vsub.s32 %v254, %v270
    %vm303 = vcmp.ge.s32.totalorder %v271, 0
    %vm304 = vcmp.ge.s32.totalorder %v272, 0
    %vm305 = vcmp.ge.s32.totalorder %v273, 0
    %vm306 = vcmp.ge.s32.totalorder %v274, 0
    %vm307 = vcmp.ge.s32.totalorder %v275, 0
    %vm308 = vcmp.ge.s32.totalorder %v276, 0
    %vm309 = vcmp.ge.s32.totalorder %v277, 0
    %vm310 = vcmp.ge.s32.totalorder %v278, 0
    %vm311 = vcmp.ge.s32.totalorder %v279, 0
    %vm312 = vcmp.ge.s32.totalorder %v280, 0
    %vm313 = vcmp.ge.s32.totalorder %v281, 0
    %vm314 = vcmp.ge.s32.totalorder %v282, 0
    %vm315 = vcmp.ge.s32.totalorder %v283, 0
    %vm316 = vcmp.ge.s32.totalorder %v284, 0
    %vm317 = vcmp.ge.s32.totalorder %v285, 0
    %vm318 = vcmp.ge.s32.totalorder %v286, 0
    %vm319 = vcmp.ge.s32.totalorder %v287, 0
    %vm320 = vcmp.ge.s32.totalorder %v288, 0
    %vm321 = vcmp.ge.s32.totalorder %v289, 0
    %vm322 = vcmp.ge.s32.totalorder %v290, 0
    %vm323 = vcmp.ge.s32.totalorder %v291, 0
    %vm324 = vcmp.ge.s32.totalorder %v292, 0
    %vm325 = vcmp.ge.s32.totalorder %v293, 0
    %vm326 = vcmp.ge.s32.totalorder %v294, 0
    %vm327 = vcmp.ge.s32.totalorder %v295, 0
    %vm328 = vcmp.ge.s32.totalorder %v296, 0
    %vm329 = vcmp.ge.s32.totalorder %v297, 0
    %vm330 = vcmp.ge.s32.totalorder %v298, 0
    %vm331 = vcmp.ge.s32.totalorder %v299, 0
    %vm332 = vcmp.ge.s32.totalorder %v300, 0
    %vm333 = vcmp.ge.s32.totalorder %v301, 0
    %vm334 = vcmp.ge.s32.totalorder %v302, 0
    %vm335 = vcmp.lt.s32.totalorder %v271, 16
    %vm336 = vcmp.lt.s32.totalorder %v272, 16
    %vm337 = vcmp.lt.s32.totalorder %v273, 16
    %vm338 = vcmp.lt.s32.totalorder %v274, 16
    %vm339 = vcmp.lt.s32.totalorder %v275, 16
    %vm340 = vcmp.lt.s32.totalorder %v276, 16
    %vm341 = vcmp.lt.s32.totalorder %v277, 16
    %vm342 = vcmp.lt.s32.totalorder %v278, 16
    %vm343 = vcmp.lt.s32.totalorder %v279, 16
    %vm344 = vcmp.lt.s32.totalorder %v280, 16
    %vm345 = vcmp.lt.s32.totalorder %v281, 16
    %vm346 = vcmp.lt.s32.totalorder %v282, 16
    %vm347 = vcmp.lt.s32.totalorder %v283, 16
    %vm348 = vcmp.lt.s32.totalorder %v284, 16
    %vm349 = vcmp.lt.s32.totalorder %v285, 16
    %vm350 = vcmp.lt.s32.totalorder %v286, 16
    %vm351 = vcmp.lt.s32.totalorder %v287, 16
    %vm352 = vcmp.lt.s32.totalorder %v288, 16
    %vm353 = vcmp.lt.s32.totalorder %v289, 16
    %vm354 = vcmp.lt.s32.totalorder %v290, 16
    %vm355 = vcmp.lt.s32.totalorder %v291, 16
    %vm356 = vcmp.lt.s32.totalorder %v292, 16
    %vm357 = vcmp.lt.s32.totalorder %v293, 16
    %vm358 = vcmp.lt.s32.totalorder %v294, 16
    %vm359 = vcmp.lt.s32.totalorder %v295, 16
    %vm360 = vcmp.lt.s32.totalorder %v296, 16
    %vm361 = vcmp.lt.s32.totalorder %v297, 16
    %vm362 = vcmp.lt.s32.totalorder %v298, 16
    %vm363 = vcmp.lt.s32.totalorder %v299, 16
    %vm364 = vcmp.lt.s32.totalorder %v300, 16
    %vm365 = vcmp.lt.s32.totalorder %v301, 16
    %vm366 = vcmp.lt.s32.totalorder %v302, 16
    %vm367 = vmand %vm303, %vm335
    %vm368 = vmand %vm304, %vm336
    %vm369 = vmand %vm305, %vm337
    %vm370 = vmand %vm306, %vm338
    %vm371 = vmand %vm307, %vm339
    %vm372 = vmand %vm308, %vm340
    %vm373 = vmand %vm309, %vm341
    %vm374 = vmand %vm310, %vm342
    %vm375 = vmand %vm311, %vm343
    %vm376 = vmand %vm312, %vm344
    %vm377 = vmand %vm313, %vm345
    %vm378 = vmand %vm314, %vm346
    %vm379 = vmand %vm315, %vm347
    %vm380 = vmand %vm316, %vm348
    %vm381 = vmand %vm317, %vm349
    %vm382 = vmand %vm318, %vm350
    %vm383 = vmand %vm319, %vm351
    %vm384 = vmand %vm320, %vm352
    %vm385 = vmand %vm321, %vm353
    %vm386 = vmand %vm322, %vm354
    %vm387 = vmand %vm323, %vm355
    %vm388 = vmand %vm324, %vm356
    %vm389 = vmand %vm325, %vm357
    %vm390 = vmand %vm326, %vm358
    %vm391 = vmand %vm327, %vm359
    %vm392 = vmand %vm328, %vm360
    %vm393 = vmand %vm329, %vm361
    %vm394 = vmand %vm330, %vm362
    %vm395 = vmand %vm331, %vm363
    %vm396 = vmand %vm332, %vm364
    %vm397 = vmand %vm333, %vm365
    %vm398 = vmand %vm334, %vm366
    %v399 = vsel %vm367, 1, 0
    %v400 = vsel %vm368, 1, 0
    %v401 = vsel %vm369, 1, 0
    %v402 = vsel %vm370, 1, 0
    %v403 = vsel %vm371, 1, 0
    %v404 = vsel %vm372, 1, 0
    %v405 = vsel %vm373, 1, 0
    %v406 = vsel %vm374, 1, 0
    %v407 = vsel %vm375, 1, 0
    %v408 = vsel %vm376, 1, 0
    %v409 = vsel %vm377, 1, 0
    %v410 = vsel %vm378, 1, 0
    %v411 = vsel %vm379, 1, 0
    %v412 = vsel %vm380, 1, 0
    %v413 = vsel %vm381, 1, 0
    %v414 = vsel %vm382, 1, 0
    %v415 = vsel %vm383, 1, 0
    %v416 = vsel %vm384, 1, 0
    %v417 = vsel %vm385, 1, 0
    %v418 = vsel %vm386, 1, 0
    %v419 = vsel %vm387, 1, 0
    %v420 = vsel %vm388, 1, 0
    %v421 = vsel %vm389, 1, 0
    %v422 = vsel %vm390, 1, 0
    %v423 = vsel %vm391, 1, 0
    %v424 = vsel %vm392, 1, 0
    %v425 = vsel %vm393, 1, 0
    %v426 = vsel %vm394, 1, 0
    %v427 = vsel %vm395, 1, 0
    %v428 = vsel %vm396, 1, 0
    %v429 = vsel %vm397, 1, 0
    %v430 = vsel %vm398, 1, 0
    %v431 = vcvt.s32.f32 %v399
    %v432 = vcvt.s32.f32 %v400
    %v433 = vcvt.s32.f32 %v401
    %v434 = vcvt.s32.f32 %v402
    %v435 = vcvt.s32.f32 %v403
    %v436 = vcvt.s32.f32 %v404
    %v437 = vcvt.s32.f32 %v405
    %v438 = vcvt.s32.f32 %v406
    %v439 = vcvt.s32.f32 %v407
    %v440 = vcvt.s32.f32 %v408
    %v441 = vcvt.s32.f32 %v409
    %v442 = vcvt.s32.f32 %v410
    %v443 = vcvt.s32.f32 %v411
    %v444 = vcvt.s32.f32 %v412
    %v445 = vcvt.s32.f32 %v413
    %v446 = vcvt.s32.f32 %v414
    %v447 = vcvt.s32.f32 %v415
    %v448 = vcvt.s32.f32 %v416
    %v449 = vcvt.s32.f32 %v417
    %v450 = vcvt.s32.f32 %v418
    %v451 = vcvt.s32.f32 %v419
    %v452 = vcvt.s32.f32 %v420
    %v453 = vcvt.s32.f32 %v421
    %v454 = vcvt.s32.f32 %v422
    %v455 = vcvt.s32.f32 %v423
    %v456 = vcvt.s32.f32 %v424
    %v457 = vcvt.s32.f32 %v425
    %v458 = vcvt.s32.f32 %v426
    %v459 = vcvt.s32.f32 %v427
    %v460 = vcvt.s32.f32 %v428
    %v461 = vcvt.s32.f32 %v429
    %v462 = vcvt.s32.f32 %v430
    %v464 = vlaneseq
    %v465 = vshrl.u32 %v464, 7
    %v466 = vsub.s32 0, %v465
    %v467 = vrot.slane %v24, %v466
    %v468 = vlaneseq
    %v469 = vshrl.u32 %v468, 7
    %v470 = vsub.s32 1, %v469
    %v471 = vrot.slane %v24, %v470
    %474 = vmatprep.subr.mxu0 0.0
    %475 = vmatpush1.msra.mxu0 %v222
    %476 = vmatprep.subr.mxu0 0.0
    %477 = vmatpush1.msra.mxu0 %v223
    %478 = vmatprep.subr.mxu0 0.0
    %479 = vmatpush1.msra.mxu0 %v224
    %480 = vmatprep.subr.mxu0 0.0
    %481 = vmatpush1.msra.mxu0 %v225
    %482 = vmatprep.subr.mxu0 0.0
    %483 = vmatpush1.msra.mxu0 %v226
    %484 = vmatprep.subr.mxu0 0.0
    %485 = vmatpush1.msra.mxu0 %v227
    %486 = vmatprep.subr.mxu0 0.0
    %487 = vmatpush1.msra.mxu0 %v228
    %488 = vmatprep.subr.mxu0 0.0
    %489 = vmatpush1.msra.mxu0 %v229
    %490 = vmatprep.subr.mxu0 0.0
    %491 = vmatpush1.msra.mxu0 %v230
    %492 = vmatprep.subr.mxu0 0.0
    %493 = vmatpush1.msra.mxu0 %v231
    %494 = vmatprep.subr.mxu0 0.0
    %495 = vmatpush1.msra.mxu0 %v232
    %496 = vmatprep.subr.mxu0 0.0
    %497 = vmatpush1.msra.mxu0 %v233
    %498 = vmatprep.subr.mxu0 0.0
    %499 = vmatpush1.msra.mxu0 %v234
    %500 = vmatprep.subr.mxu0 0.0
    %501 = vmatpush1.msra.mxu0 %v235
    %502 = vmatprep.subr.mxu0 0.0
    %503 = vmatpush1.msra.mxu0 %v236
    %504 = vmatprep.subr.mxu0 0.0
    %505 = vmatpush1.msra.mxu0 %v237
    %506 = vmatprep.subr.mxu0 0.0
    %507 = vmatpush1.msra.mxu0 %v238
    %508 = vmatprep.subr.mxu0 0.0
    %509 = vmatpush1.msra.mxu0 %v239
    %510 = vmatprep.subr.mxu0 0.0
    %511 = vmatpush1.msra.mxu0 %v240
    %512 = vmatprep.subr.mxu0 0.0
    %513 = vmatpush1.msra.mxu0 %v241
    %514 = vmatprep.subr.mxu0 0.0
    %515 = vmatpush1.msra.mxu0 %v242
    %516 = vmatprep.subr.mxu0 0.0
    %517 = vmatpush1.msra.mxu0 %v243
    %518 = vmatprep.subr.mxu0 0.0
    %519 = vmatpush1.msra.mxu0 %v244
    %520 = vmatprep.subr.mxu0 0.0
    %521 = vmatpush1.msra.mxu0 %v245
    %522 = vmatprep.subr.mxu0 0.0
    %523 = vmatpush1.msra.mxu0 %v246
    %524 = vmatprep.subr.mxu0 0.0
    %525 = vmatpush1.msra.mxu0 %v247
    %526 = vmatprep.subr.mxu0 0.0
    %527 = vmatpush1.msra.mxu0 %v248
    %528 = vmatprep.subr.mxu0 0.0
    %529 = vmatpush1.msra.mxu0 %v249
    %530 = vmatprep.subr.mxu0 0.0
    %531 = vmatpush1.msra.mxu0 %v250
    %532 = vmatprep.subr.mxu0 0.0
    %533 = vmatpush1.msra.mxu0 %v251
    %534 = vmatprep.subr.mxu0 0.0
    %535 = vmatpush1.msra.mxu0 %v252
    %536 = vmatprep.subr.mxu0 0.0
    %537 = vmatpush1.msra.mxu0 %v253
    %538 = vmatprep.mubr.f32.mxu0 %v471
    %539 = vmatmul.mubr.f32.gmra.mrb[0].mxu0 %v467
    %v540 = vpop.f32.mrb[0].mxu0
    %v541 = vadd.f32 0.0, %v540
    %v542 = vpop.f32.mrb[0].mxu0
    %543 = vdwg.mxu0
    %v544 = vmul.f32 %v541, 0.0625
    %v546 = vlaneseq
    %v547 = vshrl.u32 %v546, 7
    %v548 = vsub.s32 0, %v547
    %v549 = vrot.slane %v25, %v548
    %v550 = vlaneseq
    %v551 = vshrl.u32 %v550, 7
    %v552 = vsub.s32 1, %v551
    %v553 = vrot.slane %v25, %v552
    %556 = vmatprep.subr.mxu0 0.0
    %557 = vmatpush1.msra.mxu0 %v222
    %558 = vmatprep.subr.mxu0 0.0
    %559 = vmatpush1.msra.mxu0 %v223
    %560 = vmatprep.subr.mxu0 0.0
    %561 = vmatpush1.msra.mxu0 %v224
    %562 = vmatprep.subr.mxu0 0.0
    %563 = vmatpush1.msra.mxu0 %v225
    %564 = vmatprep.subr.mxu0 0.0
    %565 = vmatpush1.msra.mxu0 %v226
    %566 = vmatprep.subr.mxu0 0.0
    %567 = vmatpush1.msra.mxu0 %v227
    %568 = vmatprep.subr.mxu0 0.0
    %569 = vmatpush1.msra.mxu0 %v228
    %570 = vmatprep.subr.mxu0 0.0
    %571 = vmatpush1.msra.mxu0 %v229
    %572 = vmatprep.subr.mxu0 0.0
    %573 = vmatpush1.msra.mxu0 %v230
    %574 = vmatprep.subr.mxu0 0.0
    %575 = vmatpush1.msra.mxu0 %v231
    %576 = vmatprep.subr.mxu0 0.0
    %577 = vmatpush1.msra.mxu0 %v232
    %578 = vmatprep.subr.mxu0 0.0
    %579 = vmatpush1.msra.mxu0 %v233
    %580 = vmatprep.subr.mxu0 0.0
    %581 = vmatpush1.msra.mxu0 %v234
    %582 = vmatprep.subr.mxu0 0.0
    %583 = vmatpush1.msra.mxu0 %v235
    %584 = vmatprep.subr.mxu0 0.0
    %585 = vmatpush1.msra.mxu0 %v236
    %586 = vmatprep.subr.mxu0 0.0
    %587 = vmatpush1.msra.mxu0 %v237
    %588 = vmatprep.subr.mxu0 0.0
    %589 = vmatpush1.msra.mxu0 %v238
    %590 = vmatprep.subr.mxu0 0.0
    %591 = vmatpush1.msra.mxu0 %v239
    %592 = vmatprep.subr.mxu0 0.0
    %593 = vmatpush1.msra.mxu0 %v240
    %594 = vmatprep.subr.mxu0 0.0
    %595 = vmatpush1.msra.mxu0 %v241
    %596 = vmatprep.subr.mxu0 0.0
    %597 = vmatpush1.msra.mxu0 %v242
    %598 = vmatprep.subr.mxu0 0.0
    %599 = vmatpush1.msra.mxu0 %v243
    %600 = vmatprep.subr.mxu0 0.0
    %601 = vmatpush1.msra.mxu0 %v244
    %602 = vmatprep.subr.mxu0 0.0
    %603 = vmatpush1.msra.mxu0 %v245
    %604 = vmatprep.subr.mxu0 0.0
    %605 = vmatpush1.msra.mxu0 %v246
    %606 = vmatprep.subr.mxu0 0.0
    %607 = vmatpush1.msra.mxu0 %v247
    %608 = vmatprep.subr.mxu0 0.0
    %609 = vmatpush1.msra.mxu0 %v248
    %610 = vmatprep.subr.mxu0 0.0
    %611 = vmatpush1.msra.mxu0 %v249
    %612 = vmatprep.subr.mxu0 0.0
    %613 = vmatpush1.msra.mxu0 %v250
    %614 = vmatprep.subr.mxu0 0.0
    %615 = vmatpush1.msra.mxu0 %v251
    %616 = vmatprep.subr.mxu0 0.0
    %617 = vmatpush1.msra.mxu0 %v252
    %618 = vmatprep.subr.mxu0 0.0
    %619 = vmatpush1.msra.mxu0 %v253
    %620 = vmatprep.mubr.f32.mxu0 %v553
    %621 = vmatmul.mubr.f32.gmra.mrb[0].mxu0 %v549
    %v622 = vpop.f32.mrb[0].mxu0
    %v623 = vadd.f32 0.0, %v622
    %v624 = vpop.f32.mrb[0].mxu0
    %625 = vdwg.mxu0
    %v626 = vmul.f32 %v623, 0.0625
    %627 = vmatprep.subr.mxu0 %v432
    %628 = vmatpush1.msra.mxu0 %v431
    %629 = vmatprep.subr.mxu0 %v434
    %630 = vmatpush1.msra.mxu0 %v433
    %631 = vmatprep.subr.mxu0 %v436
    %632 = vmatpush1.msra.mxu0 %v435
    %633 = vmatprep.subr.mxu0 %v438
    %634 = vmatpush1.msra.mxu0 %v437
    %635 = vmatprep.subr.mxu0 %v440
    %636 = vmatpush1.msra.mxu0 %v439
    %637 = vmatprep.subr.mxu0 %v442
    %638 = vmatpush1.msra.mxu0 %v441
    %639 = vmatprep.subr.mxu0 %v444
    %640 = vmatpush1.msra.mxu0 %v443
    %641 = vmatprep.subr.mxu0 %v446
    %642 = vmatpush1.msra.mxu0 %v445
    %643 = vmatprep.subr.mxu0 %v448
    %644 = vmatpush1.msra.mxu0 %v447
    %645 = vmatprep.subr.mxu0 %v450
    %646 = vmatpush1.msra.mxu0 %v449
    %647 = vmatprep.subr.mxu0 %v452
    %648 = vmatpush1.msra.mxu0 %v451
    %649 = vmatprep.subr.mxu0 %v454
    %650 = vmatpush1.msra.mxu0 %v453
    %651 = vmatprep.subr.mxu0 %v456
    %652 = vmatpush1.msra.mxu0 %v455
    %653 = vmatprep.subr.mxu0 %v458
    %654 = vmatpush1.msra.mxu0 %v457
    %655 = vmatprep.subr.mxu0 %v460
    %656 = vmatpush1.msra.mxu0 %v459
    %657 = vmatprep.subr.mxu0 %v462
    %658 = vmatpush1.msra.mxu0 %v461
    %659 = vmatprep.subr.mxu0 0.0
    %660 = vmatpush1.msra.mxu0 0.0
    %661 = vmatprep.subr.mxu0 0.0
    %662 = vmatpush1.msra.mxu0 0.0
    %663 = vmatprep.subr.mxu0 0.0
    %664 = vmatpush1.msra.mxu0 0.0
    %665 = vmatprep.subr.mxu0 0.0
    %666 = vmatpush1.msra.mxu0 0.0
    %667 = vmatprep.subr.mxu0 0.0
    %668 = vmatpush1.msra.mxu0 0.0
    %669 = vmatprep.subr.mxu0 0.0
    %670 = vmatpush1.msra.mxu0 0.0
    %671 = vmatprep.subr.mxu0 0.0
    %672 = vmatpush1.msra.mxu0 0.0
    %673 = vmatprep.subr.mxu0 0.0
    %674 = vmatpush1.msra.mxu0 0.0
    %675 = vmatprep.subr.mxu0 0.0
    %676 = vmatpush1.msra.mxu0 0.0
    %677 = vmatprep.subr.mxu0 0.0
    %678 = vmatpush1.msra.mxu0 0.0
    %679 = vmatprep.subr.mxu0 0.0
    %680 = vmatpush1.msra.mxu0 0.0
    %681 = vmatprep.subr.mxu0 0.0
    %682 = vmatpush1.msra.mxu0 0.0
    %683 = vmatprep.subr.mxu0 0.0
    %684 = vmatpush1.msra.mxu0 0.0
    %685 = vmatprep.subr.mxu0 0.0
    %686 = vmatpush1.msra.mxu0 0.0
    %687 = vmatprep.subr.mxu0 0.0
    %688 = vmatpush1.msra.mxu0 0.0
    %689 = vmatprep.subr.mxu0 0.0
    %690 = vmatpush1.msra.mxu0 0.0
    %691 = vmatprep.mubr.f32.mxu0 0.0
    %692 = vmatmul.mubr.f32.gmra.mrb[0].mxu0 %v544
    %v693 = vpop.f32.mrb[0].mxu0
    %v694 = vadd.f32 0.0, %v693
    %v695 = vpop.f32.mrb[0].mxu0
    %v696 = vadd.f32 0.0, %v695
    %697 = vdwg.mxu0
    %v700 = vcombine.low %v694, %v696
    %v702 = vunpack.c.l.s4 1966171168
    %v703 = vunpack.c.0.s8 %v702
    %v704 = vlaneseq
    %v705 = vshrl.u32 %v704, 7
    %v706 = vsub.s32 %v703, %v705
    %v707 = vrot.slane %v700, %v706
    %v709 = vunpack.c.l.s4 1966171168
    %v710 = vunpack.c.0.s8 %v709
    %v711 = vlaneseq
    %v712 = vshrl.u32 %v711, 7
    %v713 = vsub.s32 %v710, %v712
    %v714 = vrot.slane %v707, %v713
    %v716 = vsub.f32 %v24, %v714
    %717 = vmatprep.subr.mxu0 %v432
    %718 = vmatpush1.msra.mxu0 %v431
    %719 = vmatprep.subr.mxu0 %v434
    %720 = vmatpush1.msra.mxu0 %v433
    %721 = vmatprep.subr.mxu0 %v436
    %722 = vmatpush1.msra.mxu0 %v435
    %723 = vmatprep.subr.mxu0 %v438
    %724 = vmatpush1.msra.mxu0 %v437
    %725 = vmatprep.subr.mxu0 %v440
    %726 = vmatpush1.msra.mxu0 %v439
    %727 = vmatprep.subr.mxu0 %v442
    %728 = vmatpush1.msra.mxu0 %v441
    %729 = vmatprep.subr.mxu0 %v444
    %730 = vmatpush1.msra.mxu0 %v443
    %731 = vmatprep.subr.mxu0 %v446
    %732 = vmatpush1.msra.mxu0 %v445
    %733 = vmatprep.subr.mxu0 %v448
    %734 = vmatpush1.msra.mxu0 %v447
    %735 = vmatprep.subr.mxu0 %v450
    %736 = vmatpush1.msra.mxu0 %v449
    %737 = vmatprep.subr.mxu0 %v452
    %738 = vmatpush1.msra.mxu0 %v451
    %739 = vmatprep.subr.mxu0 %v454
    %740 = vmatpush1.msra.mxu0 %v453
    %741 = vmatprep.subr.mxu0 %v456
    %742 = vmatpush1.msra.mxu0 %v455
    %743 = vmatprep.subr.mxu0 %v458
    %744 = vmatpush1.msra.mxu0 %v457
    %745 = vmatprep.subr.mxu0 %v460
    %746 = vmatpush1.msra.mxu0 %v459
    %747 = vmatprep.subr.mxu0 %v462
    %748 = vmatpush1.msra.mxu0 %v461
    %749 = vmatprep.subr.mxu0 0.0
    %750 = vmatpush1.msra.mxu0 0.0
    %751 = vmatprep.subr.mxu0 0.0
    %752 = vmatpush1.msra.mxu0 0.0
    %753 = vmatprep.subr.mxu0 0.0
    %754 = vmatpush1.msra.mxu0 0.0
    %755 = vmatprep.subr.mxu0 0.0
    %756 = vmatpush1.msra.mxu0 0.0
    %757 = vmatprep.subr.mxu0 0.0
    %758 = vmatpush1.msra.mxu0 0.0
    %759 = vmatprep.subr.mxu0 0.0
    %760 = vmatpush1.msra.mxu0 0.0
    %761 = vmatprep.subr.mxu0 0.0
    %762 = vmatpush1.msra.mxu0 0.0
    %763 = vmatprep.subr.mxu0 0.0
    %764 = vmatpush1.msra.mxu0 0.0
    %765 = vmatprep.subr.mxu0 0.0
    %766 = vmatpush1.msra.mxu0 0.0
    %767 = vmatprep.subr.mxu0 0.0
    %768 = vmatpush1.msra.mxu0 0.0
    %769 = vmatprep.subr.mxu0 0.0
    %770 = vmatpush1.msra.mxu0 0.0
    %771 = vmatprep.subr.mxu0 0.0
    %772 = vmatpush1.msra.mxu0 0.0
    %773 = vmatprep.subr.mxu0 0.0
    %774 = vmatpush1.msra.mxu0 0.0
    %775 = vmatprep.subr.mxu0 0.0
    %776 = vmatpush1.msra.mxu0 0.0
    %777 = vmatprep.subr.mxu0 0.0
    %778 = vmatpush1.msra.mxu0 0.0
    %779 = vmatprep.subr.mxu0 0.0
    %780 = vmatpush1.msra.mxu0 0.0
    %781 = vmatprep.mubr.f32.mxu0 0.0
    %782 = vmatmul.mubr.f32.gmra.mrb[0].mxu0 %v626
    %v783 = vpop.f32.mrb[0].mxu0
    %v784 = vadd.f32 0.0, %v783
    %v785 = vpop.f32.mrb[0].mxu0
    %v786 = vadd.f32 0.0, %v785
    %787 = vdwg.mxu0
    %v790 = vcombine.low %v784, %v786
    %v792 = vunpack.c.l.s4 1966171168
    %v793 = vunpack.c.0.s8 %v792
    %v794 = vlaneseq
    %v795 = vshrl.u32 %v794, 7
    %v796 = vsub.s32 %v793, %v795
    %v797 = vrot.slane %v790, %v796
    %v799 = vunpack.c.l.s4 1966171168
    %v800 = vunpack.c.0.s8 %v799
    %v801 = vlaneseq
    %v802 = vshrl.u32 %v801, 7
    %v803 = vsub.s32 %v800, %v802
    %v804 = vrot.slane %v797, %v803
    %v806 = vsub.f32 %v25, %v804
    %v807 = vmul.f32 %v716, %v716
    %v809 = vlaneseq
    %v810 = vshrl.u32 %v809, 7
    %v811 = vsub.s32 0, %v810
    %v812 = vrot.slane %v807, %v811
    %v813 = vlaneseq
    %v814 = vshrl.u32 %v813, 7
    %v815 = vsub.s32 1, %v814
    %v816 = vrot.slane %v807, %v815
    %819 = vmatprep.subr.mxu0 0.0
    %820 = vmatpush1.msra.mxu0 %v222
    %821 = vmatprep.subr.mxu0 0.0
    %822 = vmatpush1.msra.mxu0 %v223
    %823 = vmatprep.subr.mxu0 0.0
    %824 = vmatpush1.msra.mxu0 %v224
    %825 = vmatprep.subr.mxu0 0.0
    %826 = vmatpush1.msra.mxu0 %v225
    %827 = vmatprep.subr.mxu0 0.0
    %828 = vmatpush1.msra.mxu0 %v226
    %829 = vmatprep.subr.mxu0 0.0
    %830 = vmatpush1.msra.mxu0 %v227
    %831 = vmatprep.subr.mxu0 0.0
    %832 = vmatpush1.msra.mxu0 %v228
    %833 = vmatprep.subr.mxu0 0.0
    %834 = vmatpush1.msra.mxu0 %v229
    %835 = vmatprep.subr.mxu0 0.0
    %836 = vmatpush1.msra.mxu0 %v230
    %837 = vmatprep.subr.mxu0 0.0
    %838 = vmatpush1.msra.mxu0 %v231
    %839 = vmatprep.subr.mxu0 0.0
    %840 = vmatpush1.msra.mxu0 %v232
    %841 = vmatprep.subr.mxu0 0.0
    %842 = vmatpush1.msra.mxu0 %v233
    %843 = vmatprep.subr.mxu0 0.0
    %844 = vmatpush1.msra.mxu0 %v234
    %845 = vmatprep.subr.mxu0 0.0
    %846 = vmatpush1.msra.mxu0 %v235
    %847 = vmatprep.subr.mxu0 0.0
    %848 = vmatpush1.msra.mxu0 %v236
    %849 = vmatprep.subr.mxu0 0.0
    %850 = vmatpush1.msra.mxu0 %v237
    %851 = vmatprep.subr.mxu0 0.0
    %852 = vmatpush1.msra.mxu0 %v238
    %853 = vmatprep.subr.mxu0 0.0
    %854 = vmatpush1.msra.mxu0 %v239
    %855 = vmatprep.subr.mxu0 0.0
    %856 = vmatpush1.msra.mxu0 %v240
    %857 = vmatprep.subr.mxu0 0.0
    %858 = vmatpush1.msra.mxu0 %v241
    %859 = vmatprep.subr.mxu0 0.0
    %860 = vmatpush1.msra.mxu0 %v242
    %861 = vmatprep.subr.mxu0 0.0
    %862 = vmatpush1.msra.mxu0 %v243
    %863 = vmatprep.subr.mxu0 0.0
    %864 = vmatpush1.msra.mxu0 %v244
    %865 = vmatprep.subr.mxu0 0.0
    %866 = vmatpush1.msra.mxu0 %v245
    %867 = vmatprep.subr.mxu0 0.0
    %868 = vmatpush1.msra.mxu0 %v246
    %869 = vmatprep.subr.mxu0 0.0
    %870 = vmatpush1.msra.mxu0 %v247
    %871 = vmatprep.subr.mxu0 0.0
    %872 = vmatpush1.msra.mxu0 %v248
    %873 = vmatprep.subr.mxu0 0.0
    %874 = vmatpush1.msra.mxu0 %v249
    %875 = vmatprep.subr.mxu0 0.0
    %876 = vmatpush1.msra.mxu0 %v250
    %877 = vmatprep.subr.mxu0 0.0
    %878 = vmatpush1.msra.mxu0 %v251
    %879 = vmatprep.subr.mxu0 0.0
    %880 = vmatpush1.msra.mxu0 %v252
    %881 = vmatprep.subr.mxu0 0.0
    %882 = vmatpush1.msra.mxu0 %v253
    %883 = vmatprep.mubr.f32.mxu0 %v816
    %884 = vmatmul.mubr.f32.gmra.mrb[0].mxu0 %v812
    %v885 = vpop.f32.mrb[0].mxu0
    %v886 = vadd.f32 0.0, %v885
    %v887 = vpop.f32.mrb[0].mxu0
    %888 = vdwg.mxu0
    %v889 = vmul.f32 %v806, %v806
    %v891 = vlaneseq
    %v892 = vshrl.u32 %v891, 7
    %v893 = vsub.s32 0, %v892
    %v894 = vrot.slane %v889, %v893
    %v895 = vlaneseq
    %v896 = vshrl.u32 %v895, 7
    %v897 = vsub.s32 1, %v896
    %v898 = vrot.slane %v889, %v897
    %901 = vmatprep.subr.mxu0 0.0
    %902 = vmatpush1.msra.mxu0 %v222
    %903 = vmatprep.subr.mxu0 0.0
    %904 = vmatpush1.msra.mxu0 %v223
    %905 = vmatprep.subr.mxu0 0.0
    %906 = vmatpush1.msra.mxu0 %v224
    %907 = vmatprep.subr.mxu0 0.0
    %908 = vmatpush1.msra.mxu0 %v225
    %909 = vmatprep.subr.mxu0 0.0
    %910 = vmatpush1.msra.mxu0 %v226
    %911 = vmatprep.subr.mxu0 0.0
    %912 = vmatpush1.msra.mxu0 %v227
    %913 = vmatprep.subr.mxu0 0.0
    %914 = vmatpush1.msra.mxu0 %v228
    %915 = vmatprep.subr.mxu0 0.0
    %916 = vmatpush1.msra.mxu0 %v229
    %917 = vmatprep.subr.mxu0 0.0
    %918 = vmatpush1.msra.mxu0 %v230
    %919 = vmatprep.subr.mxu0 0.0
    %920 = vmatpush1.msra.mxu0 %v231
    %921 = vmatprep.subr.mxu0 0.0
    %922 = vmatpush1.msra.mxu0 %v232
    %923 = vmatprep.subr.mxu0 0.0
    %924 = vmatpush1.msra.mxu0 %v233
    %925 = vmatprep.subr.mxu0 0.0
    %926 = vmatpush1.msra.mxu0 %v234
    %927 = vmatprep.subr.mxu0 0.0
    %928 = vmatpush1.msra.mxu0 %v235
    %929 = vmatprep.subr.mxu0 0.0
    %930 = vmatpush1.msra.mxu0 %v236
    %931 = vmatprep.subr.mxu0 0.0
    %932 = vmatpush1.msra.mxu0 %v237
    %933 = vmatprep.subr.mxu0 0.0
    %934 = vmatpush1.msra.mxu0 %v238
    %935 = vmatprep.subr.mxu0 0.0
    %936 = vmatpush1.msra.mxu0 %v239
    %937 = vmatprep.subr.mxu0 0.0
    %938 = vmatpush1.msra.mxu0 %v240
    %939 = vmatprep.subr.mxu0 0.0
    %940 = vmatpush1.msra.mxu0 %v241
    %941 = vmatprep.subr.mxu0 0.0
    %942 = vmatpush1.msra.mxu0 %v242
    %943 = vmatprep.subr.mxu0 0.0
    %944 = vmatpush1.msra.mxu0 %v243
    %945 = vmatprep.subr.mxu0 0.0
    %946 = vmatpush1.msra.mxu0 %v244
    %947 = vmatprep.subr.mxu0 0.0
    %948 = vmatpush1.msra.mxu0 %v245
    %949 = vmatprep.subr.mxu0 0.0
    %950 = vmatpush1.msra.mxu0 %v246
    %951 = vmatprep.subr.mxu0 0.0
    %952 = vmatpush1.msra.mxu0 %v247
    %953 = vmatprep.subr.mxu0 0.0
    %954 = vmatpush1.msra.mxu0 %v248
    %955 = vmatprep.subr.mxu0 0.0
    %956 = vmatpush1.msra.mxu0 %v249
    %957 = vmatprep.subr.mxu0 0.0
    %958 = vmatpush1.msra.mxu0 %v250
    %959 = vmatprep.subr.mxu0 0.0
    %960 = vmatpush1.msra.mxu0 %v251
    %961 = vmatprep.subr.mxu0 0.0
    %962 = vmatpush1.msra.mxu0 %v252
    %963 = vmatprep.subr.mxu0 0.0
    %964 = vmatpush1.msra.mxu0 %v253
    %965 = vmatprep.mubr.f32.mxu0 %v898
    %966 = vmatmul.mubr.f32.gmra.mrb[0].mxu0 %v894
    %v967 = vpop.f32.mrb[0].mxu0
    %v968 = vadd.f32 0.0, %v967
    %v969 = vpop.f32.mrb[0].mxu0
    %970 = vdwg.mxu0
    %v971 = vmul.f32 %v716, %v806
    %v973 = vlaneseq
    %v974 = vshrl.u32 %v973, 7
    %v975 = vsub.s32 0, %v974
    %v976 = vrot.slane %v971, %v975
    %v977 = vlaneseq
    %v978 = vshrl.u32 %v977, 7
    %v979 = vsub.s32 1, %v978
    %v980 = vrot.slane %v971, %v979
    %983 = vmatprep.subr.mxu0 0.0
    %984 = vmatpush1.msra.mxu0 %v222
    %985 = vmatprep.subr.mxu0 0.0
    %986 = vmatpush1.msra.mxu0 %v223
    %987 = vmatprep.subr.mxu0 0.0
    %988 = vmatpush1.msra.mxu0 %v224
    %989 = vmatprep.subr.mxu0 0.0
    %990 = vmatpush1.msra.mxu0 %v225
    %991 = vmatprep.subr.mxu0 0.0
    %992 = vmatpush1.msra.mxu0 %v226
    %993 = vmatprep.subr.mxu0 0.0
    %994 = vmatpush1.msra.mxu0 %v227
    %995 = vmatprep.subr.mxu0 0.0
    %996 = vmatpush1.msra.mxu0 %v228
    %997 = vmatprep.subr.mxu0 0.0
    %998 = vmatpush1.msra.mxu0 %v229
    %999 = vmatprep.subr.mxu0 0.0
    %1000 = vmatpush1.msra.mxu0 %v230
    %1001 = vmatprep.subr.mxu0 0.0
    %1002 = vmatpush1.msra.mxu0 %v231
    %1003 = vmatprep.subr.mxu0 0.0
    %1004 = vmatpush1.msra.mxu0 %v232
    %1005 = vmatprep.subr.mxu0 0.0
    %1006 = vmatpush1.msra.mxu0 %v233
    %1007 = vmatprep.subr.mxu0 0.0
    %1008 = vmatpush1.msra.mxu0 %v234
    %1009 = vmatprep.subr.mxu0 0.0
    %1010 = vmatpush1.msra.mxu0 %v235
    %1011 = vmatprep.subr.mxu0 0.0
    %1012 = vmatpush1.msra.mxu0 %v236
    %1013 = vmatprep.subr.mxu0 0.0
    %1014 = vmatpush1.msra.mxu0 %v237
    %1015 = vmatprep.subr.mxu0 0.0
    %1016 = vmatpush1.msra.mxu0 %v238
    %1017 = vmatprep.subr.mxu0 0.0
    %1018 = vmatpush1.msra.mxu0 %v239
    %1019 = vmatprep.subr.mxu0 0.0
    %1020 = vmatpush1.msra.mxu0 %v240
    %1021 = vmatprep.subr.mxu0 0.0
    %1022 = vmatpush1.msra.mxu0 %v241
    %1023 = vmatprep.subr.mxu0 0.0
    %1024 = vmatpush1.msra.mxu0 %v242
    %1025 = vmatprep.subr.mxu0 0.0
    %1026 = vmatpush1.msra.mxu0 %v243
    %1027 = vmatprep.subr.mxu0 0.0
    %1028 = vmatpush1.msra.mxu0 %v244
    %1029 = vmatprep.subr.mxu0 0.0
    %1030 = vmatpush1.msra.mxu0 %v245
    %1031 = vmatprep.subr.mxu0 0.0
    %1032 = vmatpush1.msra.mxu0 %v246
    %1033 = vmatprep.subr.mxu0 0.0
    %1034 = vmatpush1.msra.mxu0 %v247
    %1035 = vmatprep.subr.mxu0 0.0
    %1036 = vmatpush1.msra.mxu0 %v248
    %1037 = vmatprep.subr.mxu0 0.0
    %1038 = vmatpush1.msra.mxu0 %v249
    %1039 = vmatprep.subr.mxu0 0.0
    %1040 = vmatpush1.msra.mxu0 %v250
    %1041 = vmatprep.subr.mxu0 0.0
    %1042 = vmatpush1.msra.mxu0 %v251
    %1043 = vmatprep.subr.mxu0 0.0
    %1044 = vmatpush1.msra.mxu0 %v252
    %1045 = vmatprep.subr.mxu0 0.0
    %1046 = vmatpush1.msra.mxu0 %v253
    %1047 = vmatprep.mubr.f32.mxu0 %v980
    %1048 = vmatmul.mubr.f32.gmra.mrb[0].mxu0 %v976
    %v1049 = vpop.f32.mrb[0].mxu0
    %v1050 = vadd.f32 0.0, %v1049
    %v1051 = vpop.f32.mrb[0].mxu0
    %1052 = vdwg.mxu0
    %v1053 = vrsqrt.pop %v886
    %v1054 = vmul.f32 %v886, %v1053
    %vm1055 = vcmp.eq.f32.partialorder %v886, inf
    %v1056 = vsel %vm1055, %v886, %v1054
    %vm1057 = vcmp.eq.f32.partialorder %v886, 0.0
    %v1058 = vand.u32 %v886, 2147483648
    %v1059 = vsel %vm1057, %v1058, %v1056
    %v1060 = vrsqrt.pop %v968
    %v1061 = vmul.f32 %v968, %v1060
    %vm1062 = vcmp.eq.f32.partialorder %v968, inf
    %v1063 = vsel %vm1062, %v968, %v1061
    %vm1064 = vcmp.eq.f32.partialorder %v968, 0.0
    %v1065 = vand.u32 %v968, 2147483648
    %v1066 = vsel %vm1064, %v1065, %v1063
    %v1067 = vmul.f32 %v1059, %v1066
    %v1068 = vadd.f32 %v1067, 0.001
    %v1069 = vrcp.pop %v1068
    %v1070 = vmul.f32 %v1050, %v1069
    %vm1071 = vcmask 1040384
    %v1072 = vsel %vm1071, %v1070, 0.0
    %1073 = vadd.xlane.f32.xlu0 %v1072
    %v1074 = vpop.xlane.xlu0 %1073
    %v1075 = vrot.slane %v1074, 4
    %v1076 = vadd.f32 %v1074, %v1075
    %v1077 = vrot.slane %v1076, 2
    %v1078 = vadd.f32 %v1076, %v1077
    %v1079 = vrot.slane %v1078, 1
    %v1080 = vadd.f32 %v1078, %v1079
    %s1081 = vtos %v1080
    %s1082 = smul.f32 %s1081, 0.0625
    %s1083 = ssub.f32 1.0, %s1082
    %s1084 = scalar_lea.smem [#allocation5], 0
    %1085 = sst [smem:[%s1084]] %s1083
    // Predicated region
    $region14: #{tpu_custom_call.1} parent=1 // pred_check
      _
    $region15: #{tpu_custom_call.1} parent=1 // pred_check_branch
      %1087 = sbr.rel (0) target = $region17
    $region16: #{tpu_custom_call.1} parent=1 // pred_region
      %s1089 = ssub.s32 16, 16
      %1090 = vsyncadd [#allocation4], %s1089
      %1093 = dma.smem_to_hbm [#allocation5], 16, %s2, [#allocation4]
    $region17: #{tpu_custom_call.1} parent=1 // pred_fallthru
      _
    // Predicated region
    $region18: #{tpu_custom_call.1} parent=1 // pred_check
      _
    $region19: #{tpu_custom_call.1} parent=1 // pred_check_branch
      %1095 = sbr.rel (0) target = $region21
    $region20: #{tpu_custom_call.1} parent=1 // pred_region
      %1096 = dma.done [#allocation4], 16
    $region21: #{tpu_custom_call.1} parent=1 // pred_fallthru
      _
    %1097 = sfence
    %1098 = vsyncpa [#allocation3], 1
    %1099 = vsyncpa [#allocation4], 1

</llo_original>
